<compile_context>
chip_gen: v7x
topology: tpu7x:2x2x1
jax: 0.10.0
libtpu: 0.0.40
codegen_flags: <defaults>
</compile_context>

<pallas_src>
import functools

import jax
import jax.numpy as jnp
from jax import lax
from jax.experimental import pallas as pl
from jax.experimental.pallas import tpu as pltpu

# ---- config (small, consistent with the module) -----------------------------
N_VOCAB = 32
EMBED = 32
SEQ_LEN = 16
BATCH = 2
NUM_FILTERS = 8
FILTER_SIZES = (2, 3, 4)
NUM_CLASSES = 4


def make_textcnn_kernel(filter_sizes, batch, seq_len, num_filters):
    n = len(filter_sizes)
    nf = n * num_filters

    def kernel(lhs_ref, w_ref, b_ref, wfc_ref, bfc_ref, out_ref):
        # lhs_ref: (B*L, kmax*E) bf16  shared im2col (all branches)
        # w_ref  : (kmax*E, n*F) bf16  lane-concatenated conv weights (zero rows
        #                              for offsets >= k of each branch)
        # b_ref  : (1, n*F)      f32   concatenated conv biases
        # wfc_ref: (n*F, C)      f32   unsplit fc weight
        # bfc_ref: (1, C)        f32
        # out_ref: (B, C)        f32
        # Single fused conv matmul for every filter size.
        acc = jnp.dot(lhs_ref[...], w_ref[...],
                      preferred_element_type=jnp.float32)        # (B*L, n*F) f32
        acc = acc.reshape(batch, seq_len, nf)                    # (B, L, n*F)

        # Mask invalid trailing windows per branch: column band i (filters of
        # size k_i) is only valid for t < L - k_i + 1.
        t_idx = lax.broadcasted_iota(jnp.int32, (batch, seq_len, nf), 1)
        col = lax.broadcasted_iota(jnp.int32, (batch, seq_len, nf), 2)
        valid = jnp.zeros((batch, seq_len, nf), jnp.bool_)
        for i, k in enumerate(filter_sizes):
            in_band = (col >= i * num_filters) & (col < (i + 1) * num_filters)
            valid = valid | (in_band & (t_idx < (seq_len - k + 1)))
        acc = jnp.where(valid, acc, -1e30)

        pooled = jnp.max(acc, axis=1)                            # (B, n*F) max-over-time
        # Bias + ReLU hoisted past the max (both monotone, per-filter).
        feat = jnp.maximum(pooled + b_ref[...], 0.0)             # (B, n*F) f32
        # Single f32 classifier matmul against the unsplit fc weight.
        logits = jnp.dot(feat, wfc_ref[...],
                         preferred_element_type=jnp.float32)     # (B, C)
        out_ref[...] = (logits + bfc_ref[...]).astype(out_ref.dtype)

    return kernel


def prepare_params(conv_ws, conv_bs, wfc, bfc, filter_sizes=FILTER_SIZES):
    """One-time parameter consolidation (call once, OUTSIDE the jitted forward)."""
    kmax = max(filter_sizes)
    embed = conv_ws[0].shape[1]
    F_ = conv_ws[0].shape[2]
    blocks = []
    for k, w in zip(filter_sizes, conv_ws):
        wk = w.reshape(k * embed, F_)
        # Zero rows for window offsets >= k so the shared (kmax*E)-wide im2col
        # contributes nothing there.
        wk = jnp.pad(wk, ((0, (kmax - k) * embed), (0, 0)))
        blocks.append(wk)
    w_comb = jnp.concatenate(blocks, axis=1).astype(jnp.bfloat16)      # (kmax*E, n*F)
    b_comb = jnp.concatenate([b.reshape(1, F_) for b in conv_bs],
                             axis=1).astype(jnp.float32)               # (1, n*F)
    wfc_f32 = wfc.astype(jnp.float32)                                  # (n*F, C)
    bfc_f32 = bfc.reshape(1, -1).astype(jnp.float32)                   # (1, C)
    return w_comb, b_comb, wfc_f32, bfc_f32


@functools.partial(jax.jit, static_argnames=("filter_sizes",))
def textcnn_forward(tokens, emb_table, w_comb, b_comb, wfc, bfc,
                    filter_sizes=FILTER_SIZES):
    # Embedding gather in plain JAX (padding_idx row already zeroed at init).
    emb = jnp.take(emb_table, tokens, axis=0).astype(jnp.float32)      # (B, L, E)
    B, L, E = emb.shape
    kmax = max(filter_sizes)
    nf = w_comb.shape[1]
    num_filters = nf // len(filter_sizes)
    C = wfc.shape[1]

    # Shared im2col, built ONCE for all filter sizes: row (b, t) holds the kmax
    # consecutive embeddings starting at t.  Time is zero-padded by kmax-1;
    # out-of-range positions are either zero-weighted (offsets >= k) or masked
    # to -inf inside the kernel (t >= L - k + 1).
    emb_p = jnp.pad(emb, ((0, 0), (0, kmax - 1), (0, 0)))
    lhs = jnp.concatenate([emb_p[:, j:j + L, :] for j in range(kmax)], axis=-1)
    lhs = lhs.reshape(B * L, kmax * E).astype(jnp.bfloat16)            # (B*L, kmax*E)

    in_arrays = [lhs, w_comb, b_comb, wfc, bfc]
    flops = 2 * (B * L) * (kmax * E) * nf + 2 * B * nf * C
    bytes_accessed = (sum(int(a.size) * a.dtype.itemsize for a in in_arrays)
                      + B * C * 4)

    kernel = make_textcnn_kernel(filter_sizes, B, L, num_filters)
    out = pl.pallas_call(
        kernel,
        out_shape=jax.ShapeDtypeStruct((B, C), jnp.float32),
        in_specs=[pl.BlockSpec(memory_space=pltpu.MemorySpace.VMEM)] * len(in_arrays),
        out_specs=pl.BlockSpec(memory_space=pltpu.MemorySpace.VMEM),
        cost_estimate=pl.CostEstimate(flops=int(flops), transcendentals=0,
                                      bytes_accessed=int(bytes_accessed)),
    )(*in_arrays)
    return out
    # TODO(synk): for non-toy B/L, add a batch-parallel grid axis
    #   (BlockSpec over B, dimension_semantics=("parallel",)) so both v7x
    #   TensorCores are used, and fold the gather + windowing into the kernel
    #   via PrefetchScalarGridSpec(num_scalar_prefetch=1) on the tokens.


def textcnn_reference(tokens, emb_table, conv_ws, conv_bs, wfc, bfc,
                      filter_sizes=FILTER_SIZES):
    """Pure-JAX f32 reference mirroring the PyTorch forward."""
    emb = jnp.take(emb_table, tokens, axis=0).astype(jnp.float32)      # (B, L, E)
    B, L, E = emb.shape
    feats = []
    for k, w, b in zip(filter_sizes, conv_ws, conv_bs):
        Lout = L - k + 1
        acc = jnp.zeros((B, Lout, w.shape[2]), jnp.float32)
        for j in range(k):
            acc = acc + jnp.einsum("ble,ef->blf", emb[:, j:j + Lout, :], w[j])
        acc = jnp.maximum(acc + b, 0.0)
        feats.append(jnp.max(acc, axis=1))
    feat = jnp.concatenate(feats, axis=-1)
    return feat @ wfc + bfc


def init_params(key):
    keys = jax.random.split(key, 3 + 2 * len(FILTER_SIZES))
    # Embedding table; padding_idx = N_VOCAB - 1 row is zeroed (as nn.Embedding does).
    emb_table = 0.1 * jax.random.normal(keys[0], (N_VOCAB, EMBED), jnp.float32)
    emb_table = emb_table.at[N_VOCAB - 1].set(0.0)

    conv_ws, conv_bs = [], []
    for i, k in enumerate(FILTER_SIZES):
        w = 0.1 * jax.random.normal(keys[1 + 2 * i], (k, EMBED, NUM_FILTERS),
                                    jnp.float32)
        b = 0.1 * jax.random.normal(keys[2 + 2 * i], (1, NUM_FILTERS), jnp.float32)
        conv_ws.append(w)
        conv_bs.append(b)

    wfc = 0.1 * jax.random.normal(keys[-2],
                                  (NUM_FILTERS * len(FILTER_SIZES), NUM_CLASSES),
                                  jnp.float32)
    bfc = 0.1 * jax.random.normal(keys[-1], (1, NUM_CLASSES), jnp.float32)
    return emb_table, tuple(conv_ws), tuple(conv_bs), wfc, bfc


if __name__ == "__main__":
    key = jax.random.PRNGKey(0)
    k_tok, k_par = jax.random.split(key)

    tokens = jax.random.randint(k_tok, (BATCH, SEQ_LEN), 0, N_VOCAB, jnp.int32)
    emb_table, conv_ws, conv_bs, wfc, bfc = init_params(k_par)

    # One-time parameter consolidation (outside the jitted forward).
    w_comb, b_comb, wfc_f32, bfc_f32 = prepare_params(conv_ws, conv_bs, wfc, bfc)

    out = textcnn_forward(tokens, emb_table, w_comb, b_comb, wfc_f32, bfc_f32)
    out = jax.block_until_ready(out)
    assert out.shape == (BATCH, NUM_CLASSES)

    ref = textcnn_reference(tokens, emb_table, conv_ws, conv_bs, wfc, bfc)
    assert jnp.allclose(out, ref, atol=2e-2, rtol=2e-2), (out, ref)

    print("KERNEL_OK")
</pallas_src>

<mosaic_0001>
module attributes {stable_mosaic.version = 11 : i64} {
  func.func @kernel(%arg0: memref<32x128xbf16, #tpu.memory_space<vmem>>, %arg1: memref<128x24xbf16, #tpu.memory_space<vmem>>, %arg2: memref<1x24xf32, #tpu.memory_space<vmem>>, %arg3: memref<24x4xf32, #tpu.memory_space<vmem>>, %arg4: memref<1x4xf32, #tpu.memory_space<vmem>>, %arg5: memref<2x4xf32, #tpu.memory_space<vmem>>) attributes {dimension_semantics = [], scalar_prefetch = 0 : i64, scratch_operands = 0 : i64, tpu.core_type = #tpu.core_type<tc>} {
    %c0 = arith.constant 0 : index
    %c0_0 = arith.constant 0 : index
    %0 = vector.load %arg0[%c0, %c0_0] : memref<32x128xbf16, #tpu.memory_space<vmem>>, vector<32x128xbf16>
    %c0_1 = arith.constant 0 : index
    %c0_2 = arith.constant 0 : index
    %1 = vector.load %arg1[%c0_1, %c0_2] : memref<128x24xbf16, #tpu.memory_space<vmem>>, vector<128x24xbf16>
    %cst = arith.constant dense<0.000000e+00> : vector<32x24xf32>
    %2 = tpu.matmul %0, %1, %cst {dimension_numbers = #tpu.dot_dimension_numbers<[1], [0], [0], [1], [0, 0, 1, 1], [], []>} : vector<32x128xbf16>, vector<128x24xbf16>, vector<32x24xf32> -> vector<32x24xf32>
    %3 = vector.shape_cast %2 : vector<32x24xf32> to vector<2x16x24xf32>
    %4 = tpu.iota {dimensions = array<i32: 1>} : vector<2x16x24xi32>
    %5 = tpu.iota {dimensions = array<i32: 2>} : vector<2x16x24xi32>
    %false = arith.constant false
    %6 = vector.broadcast %false : i1 to vector<2x16x24xi1>
    %c0_i32 = arith.constant 0 : i32
    %7 = vector.broadcast %c0_i32 : i32 to vector<2x16x24xi32>
    %8 = arith.cmpi sge, %5, %7 : vector<2x16x24xi32>
    %c8_i32 = arith.constant 8 : i32
    %9 = vector.broadcast %c8_i32 : i32 to vector<2x16x24xi32>
    %10 = arith.cmpi slt, %5, %9 : vector<2x16x24xi32>
    %11 = arith.andi %8, %10 : vector<2x16x24xi1>
    %c15_i32 = arith.constant 15 : i32
    %12 = vector.broadcast %c15_i32 : i32 to vector<2x16x24xi32>
    %13 = arith.cmpi slt, %4, %12 : vector<2x16x24xi32>
    %14 = arith.andi %11, %13 : vector<2x16x24xi1>
    %15 = arith.ori %6, %14 : vector<2x16x24xi1>
    %c8_i32_3 = arith.constant 8 : i32
    %16 = vector.broadcast %c8_i32_3 : i32 to vector<2x16x24xi32>
    %17 = arith.cmpi sge, %5, %16 : vector<2x16x24xi32>
    %c16_i32 = arith.constant 16 : i32
    %18 = vector.broadcast %c16_i32 : i32 to vector<2x16x24xi32>
    %19 = arith.cmpi slt, %5, %18 : vector<2x16x24xi32>
    %20 = arith.andi %17, %19 : vector<2x16x24xi1>
    %c14_i32 = arith.constant 14 : i32
    %21 = vector.broadcast %c14_i32 : i32 to vector<2x16x24xi32>
    %22 = arith.cmpi slt, %4, %21 : vector<2x16x24xi32>
    %23 = arith.andi %20, %22 : vector<2x16x24xi1>
    %24 = arith.ori %15, %23 : vector<2x16x24xi1>
    %c16_i32_4 = arith.constant 16 : i32
    %25 = vector.broadcast %c16_i32_4 : i32 to vector<2x16x24xi32>
    %26 = arith.cmpi sge, %5, %25 : vector<2x16x24xi32>
    %c24_i32 = arith.constant 24 : i32
    %27 = vector.broadcast %c24_i32 : i32 to vector<2x16x24xi32>
    %28 = arith.cmpi slt, %5, %27 : vector<2x16x24xi32>
    %29 = arith.andi %26, %28 : vector<2x16x24xi1>
    %c13_i32 = arith.constant 13 : i32
    %30 = vector.broadcast %c13_i32 : i32 to vector<2x16x24xi32>
    %31 = arith.cmpi slt, %4, %30 : vector<2x16x24xi32>
    %32 = arith.andi %29, %31 : vector<2x16x24xi1>
    %33 = arith.ori %24, %32 : vector<2x16x24xi1>
    %cst_5 = arith.constant -1.000000e+30 : f32
    %34 = vector.broadcast %cst_5 : f32 to vector<2x16x24xf32>
    %35 = arith.select %33, %3, %34 : vector<2x16x24xi1>, vector<2x16x24xf32>
    %cst_6 = arith.constant dense<0xFF800000> : vector<2x24xf32>
    %36 = vector.multi_reduction <maximumf>, %35, %cst_6 [1] : vector<2x16x24xf32> to vector<2x24xf32>
    %c0_7 = arith.constant 0 : index
    %c0_8 = arith.constant 0 : index
    %37 = vector.load %arg2[%c0_7, %c0_8] : memref<1x24xf32, #tpu.memory_space<vmem>>, vector<1x24xf32>
    %38 = vector.broadcast %37 : vector<1x24xf32> to vector<2x24xf32>
    %39 = arith.addf %36, %38 : vector<2x24xf32>
    %cst_9 = arith.constant 0.000000e+00 : f32
    %40 = vector.broadcast %cst_9 : f32 to vector<2x24xf32>
    %41 = arith.maximumf %39, %40 : vector<2x24xf32>
    %c0_10 = arith.constant 0 : index
    %c0_11 = arith.constant 0 : index
    %42 = vector.load %arg3[%c0_10, %c0_11] : memref<24x4xf32, #tpu.memory_space<vmem>>, vector<24x4xf32>
    %cst_12 = arith.constant dense<0.000000e+00> : vector<2x4xf32>
    %43 = tpu.matmul %41, %42, %cst_12 {dimension_numbers = #tpu.dot_dimension_numbers<[1], [0], [0], [1], [0, 0, 1, 1], [], []>} : vector<2x24xf32>, vector<24x4xf32>, vector<2x4xf32> -> vector<2x4xf32>
    %c0_13 = arith.constant 0 : index
    %c0_14 = arith.constant 0 : index
    %44 = vector.load %arg4[%c0_13, %c0_14] : memref<1x4xf32, #tpu.memory_space<vmem>>, vector<1x4xf32>
    %45 = vector.broadcast %44 : vector<1x4xf32> to vector<2x4xf32>
    %46 = arith.addf %43, %45 : vector<2x4xf32>
    %c0_15 = arith.constant 0 : index
    %c0_16 = arith.constant 0 : index
    %47 = vector.load %arg5[%c0_15, %c0_16] : memref<2x4xf32, #tpu.memory_space<vmem>>, vector<2x4xf32>
    tpu.vector_store %arg5[%c0_15, %c0_16], %46 {strides = array<i32>} : memref<2x4xf32, #tpu.memory_space<vmem>>, vector<2x4xf32>,
    return
  }
}

</mosaic_0001>

<llo_original>
// kernel: textcnn_forward.1
$region0: #{textcnn_forward.1}
  #allocation0 [shape = 'u32[]', space=smem, size = 0x4, offset = 0x4, fixed_abs, tag = 'smem constant byte address 0x4 - core index']
  #allocation1 [shape = 'u32[144,128]{1,0:T(1,128)}', space=vmem, size = 0x12000, scoped, tag = 'internal scratch']
  %s0 = inlined_call_operand.vmem [shape: bf16[32,128], index: 0, kind: input, shape index: {}]
  %s1 = inlined_call_operand.vmem [shape: bf16[128,24], index: 1, kind: input, shape index: {}]
  %s2 = inlined_call_operand.vmem [shape: f32[1,24], index: 2, kind: input, shape index: {}]
  %s3 = inlined_call_operand.vmem [shape: f32[24,4], index: 3, kind: input, shape index: {}]
  %s4 = inlined_call_operand.vmem [shape: f32[1,4], index: 4, kind: input, shape index: {}]
  %s5 = inlined_call_operand.hbm [shape: f32[2,4], index: 5, kind: output, shape index: {}]
  %s6 = sld [smem:[#allocation0]]
  $region30: #{textcnn_forward.1} parent=0
    _
  %s8 = ssub.s32 1, %s6
  %s9 = scalar_select 0, %s8, %s6
  $region1: #{textcnn_forward.1} parent=0
    #allocation2 [shape = 'u8[1024]{0}', space=vmem, size = 0x400, scoped, tag = 'output window, operand 0, single buffered']
    #allocation3 [shape = 's32[1]{0}', space=sflag, size = 0x4, scoped, tag = 'scoped memory for textcnn_forward.1']
    %10 = vsyncpa [#allocation3], 0
    // Predicated region
    $region2: #{textcnn_forward.1} parent=1 // pred_check
      _
    $region3: #{textcnn_forward.1} parent=1 // pred_check_branch
      %12 = sbr.rel (0) target = $region5
    $region4: #{textcnn_forward.1} parent=1 // pred_region
      _
    $region5: #{textcnn_forward.1} parent=1 // pred_fallthru
      _
    // Predicated region
    $region6: #{textcnn_forward.1} parent=1 // pred_check
      _
    $region7: #{textcnn_forward.1} parent=1 // pred_check_branch
      %14 = sbr.rel (0) target = $region9
    $region8: #{textcnn_forward.1} parent=1 // pred_region
      _
    $region9: #{textcnn_forward.1} parent=1 // pred_fallthru
      _
    // Predicated region
    $region10: #{textcnn_forward.1} parent=1 // pred_check
      _
    $region11: #{textcnn_forward.1} parent=1 // pred_check_branch
      %16 = sbr.rel (0) target = $region13
    $region12: #{textcnn_forward.1} parent=1 // pred_region
      _
    $region13: #{textcnn_forward.1} parent=1 // pred_fallthru
      _
    // Predicated region
    $region14: #{textcnn_forward.1} parent=1 // pred_check
      _
    $region15: #{textcnn_forward.1} parent=1 // pred_check_branch
      %18 = sbr.rel (0) target = $region17
    $region16: #{textcnn_forward.1} parent=1 // pred_region
      _
    $region17: #{textcnn_forward.1} parent=1 // pred_fallthru
      _
    // Predicated region
    $region18: #{textcnn_forward.1} parent=1 // pred_check
      _
    $region19: #{textcnn_forward.1} parent=1 // pred_check_branch
      %20 = sbr.rel (0) target = $region21
    $region20: #{textcnn_forward.1} parent=1 // pred_region
      _
    $region21: #{textcnn_forward.1} parent=1 // pred_fallthru
      _
    %v22 = vld [vmem:[%s0] sm:$0xf]
    %v23 = vld [vmem:[%s0 + $0x4] sm:$0xf]
    %v24 = vld [vmem:[%s0 + $0x8] sm:$0xf]
    %v25 = vld [vmem:[%s0 + $0xc] sm:$0xf]
    %v26 = vld [vmem:[%s1] sm:$0xf]
    %v27 = vld [vmem:[%s1 + $0x4] sm:$0xf]
    %v28 = vld [vmem:[%s1 + $0x8] sm:$0xf]
    %v29 = vld [vmem:[%s1 + $0xc] sm:$0xf]
    %v30 = vld [vmem:[%s1 + $0x10] sm:$0xf]
    %v31 = vld [vmem:[%s1 + $0x14] sm:$0xf]
    %v32 = vld [vmem:[%s1 + $0x18] sm:$0xf]
    %v33 = vld [vmem:[%s1 + $0x1c] sm:$0xf]
    %v34 = vld [vmem:[%s1 + $0x20] sm:$0xf]
    %v35 = vld [vmem:[%s1 + $0x24] sm:$0xf]
    %v36 = vld [vmem:[%s1 + $0x28] sm:$0xf]
    %v37 = vld [vmem:[%s1 + $0x2c] sm:$0xf]
    %v38 = vld [vmem:[%s1 + $0x30] sm:$0xf]
    %v39 = vld [vmem:[%s1 + $0x34] sm:$0xf]
    %v40 = vld [vmem:[%s1 + $0x38] sm:$0xf]
    %v41 = vld [vmem:[%s1 + $0x3c] sm:$0xf]
    %v46 = vunpack.c.l.b16 %v22
    %v47 = vunpack.c.l.b16 %v23
    %v48 = vunpack.c.l.b16 %v24
    %v49 = vunpack.c.l.b16 %v25
    %v50 = vpack.c.b16 %v47, %v46
    %v51 = vpack.c.b16 %v49, %v48
    %v70 = vunpack.c.l.b16 %v26
    %v71 = vunpack.c.l.b16 %v27
    %v72 = vunpack.c.l.b16 %v28
    %v73 = vunpack.c.l.b16 %v29
    %v74 = vunpack.c.l.b16 %v30
    %v75 = vunpack.c.l.b16 %v31
    %v76 = vunpack.c.l.b16 %v32
    %v77 = vunpack.c.l.b16 %v33
    %v78 = vunpack.c.l.b16 %v34
    %v79 = vunpack.c.l.b16 %v35
    %v80 = vunpack.c.l.b16 %v36
    %v81 = vunpack.c.l.b16 %v37
    %v82 = vunpack.c.l.b16 %v38
    %v83 = vunpack.c.l.b16 %v39
    %v84 = vunpack.c.l.b16 %v40
    %v85 = vunpack.c.l.b16 %v41
    %v86 = vpack.c.b16 %v71, %v70
    %v87 = vpack.c.b16 %v73, %v72
    %v88 = vpack.c.b16 %v75, %v74
    %v89 = vpack.c.b16 %v77, %v76
    %v90 = vpack.c.b16 %v79, %v78
    %v91 = vpack.c.b16 %v81, %v80
    %v92 = vpack.c.b16 %v83, %v82
    %v93 = vpack.c.b16 %v85, %v84
    %102 = vmatprep.subr.bf16.mxu0 0
    %103 = vmatpush1.bf16.msra.mxu0 %v86
    %104 = vmatprep.subr.bf16.mxu0 0
    %105 = vmatpush1.bf16.msra.mxu0 %v87
    %106 = vmatprep.subr.bf16.mxu0 0
    %107 = vmatpush1.bf16.msra.mxu0 %v88
    %108 = vmatprep.subr.bf16.mxu0 0
    %109 = vmatpush1.bf16.msra.mxu0 %v89
    %110 = vmatprep.subr.bf16.mxu0 0
    %111 = vmatpush1.bf16.msra.mxu0 %v90
    %112 = vmatprep.subr.bf16.mxu0 0
    %113 = vmatpush1.bf16.msra.mxu0 %v91
    %114 = vmatprep.subr.bf16.mxu0 0
    %115 = vmatpush1.bf16.msra.mxu0 %v92
    %116 = vmatprep.subr.bf16.mxu0 0
    %117 = vmatpush1.bf16.msra.mxu0 %v93
    %118 = vmatprep.subr.bf16.mxu0 0
    %119 = vmatpush1.bf16.msra.mxu0 0
    %120 = vmatprep.subr.bf16.mxu0 0
    %121 = vmatpush1.bf16.msra.mxu0 0
    %122 = vmatprep.subr.bf16.mxu0 0
    %123 = vmatpush1.bf16.msra.mxu0 0
    %124 = vmatprep.subr.bf16.mxu0 0
    %125 = vmatpush1.bf16.msra.mxu0 0
    %126 = vmatprep.subr.bf16.mxu0 0
    %127 = vmatpush1.bf16.msra.mxu0 0
    %128 = vmatprep.subr.bf16.mxu0 0
    %129 = vmatpush1.bf16.msra.mxu0 0
    %130 = vmatprep.subr.bf16.mxu0 0
    %131 = vmatpush1.bf16.msra.mxu0 0
    %132 = vmatprep.subr.bf16.mxu0 0
    %133 = vmatpush1.bf16.msra.mxu0 0
    %134 = vmatprep.mubr.bf16.mxu0 0
    %135 = vmatmul.mubr.bf16.gmra.mrb[0].mxu0 %v50
    %v136 = vpop.f32.mrb[0].mxu0
    %v137 = vadd.f32 0.0, %v136
    %v138 = vpop.f32.mrb[0].mxu0
    %v139 = vpop.f32.mrb[0].mxu0
    %v140 = vadd.f32 0.0, %v139
    %v141 = vpop.f32.mrb[0].mxu0
    %142 = vmatprep.mubr.bf16.mxu0 0
    %143 = vmatmul.mubr.bf16.gmra.mrb[0].mxu0 %v51
    %v144 = vpop.f32.mrb[0].mxu0
    %v145 = vadd.f32 0.0, %v144
    %v146 = vpop.f32.mrb[0].mxu0
    %v147 = vpop.f32.mrb[0].mxu0
    %v148 = vadd.f32 0.0, %v147
    %v149 = vpop.f32.mrb[0].mxu0
    %150 = vdwg.mxu0
    %v151 = vlaneseq
    %v152 = vshrl.u32 %v151, 7
    %v153 = vadd.s32 %v152, 8
    %v154 = vlaneseq
    %v155 = vand.u32 %v154, 127
    %vm156 = vcmp.ge.s32.totalorder %v155, 0
    %vm157 = vcmp.lt.s32.totalorder %v155, 8
    %vm158 = vmand %vm156, %vm157
    %vm159 = vcmp.lt.s32.totalorder %v152, 15
    %vm160 = vcmp.lt.s32.totalorder %v153, 15
    %vm161 = vmand %vm158, %vm159
    %vm162 = vmand %vm158, %vm160
    %vm163 = vcmp.ge.s32.totalorder %v155, 8
    %vm164 = vcmp.lt.s32.totalorder %v155, 16
    %vm165 = vmand %vm163, %vm164
    %vm166 = vcmp.lt.s32.totalorder %v152, 14
    %vm167 = vcmp.lt.s32.totalorder %v153, 14
    %vm168 = vmand %vm165, %vm166
    %vm169 = vmand %vm165, %vm167
    %vm170 = vmor %vm161, %vm168
    %vm171 = vmor %vm162, %vm169
    %vm172 = vcmp.ge.s32.totalorder %v155, 16
    %vm173 = vcmp.lt.s32.totalorder %v155, 24
    %vm174 = vmand %vm172, %vm173
    %vm175 = vcmp.lt.s32.totalorder %v152, 13
    %vm176 = vcmp.lt.s32.totalorder %v153, 13
    %vm177 = vmand %vm174, %vm175
    %vm178 = vmand %vm174, %vm176
    %vm179 = vmor %vm170, %vm177
    %vm180 = vmor %vm171, %vm178
    %v181 = vsel %vm179, %v137, -1e+30
    %v182 = vsel %vm180, %v140, -1e+30
    %v183 = vsel %vm179, %v145, -1e+30
    %v184 = vsel %vm180, %v148, -1e+30
    %vm185 = vcmask 195584
    %v186 = vsel %vm185, %v181, -inf
    %v187 = vsel %vm185, %v182, -inf
    %v188 = vmax.f32 %v186, %v187
    %v189 = vrot.slane %v188, 4
    %v190 = vmax.f32 %v188, %v189
    %v191 = vrot.slane %v190, 2
    %v192 = vmax.f32 %v190, %v191
    %v193 = vrot.slane %v192, 1
    %v194 = vmax.f32 %v192, %v193
    %v195 = vsel %vm185, %v183, -inf
    %v196 = vsel %vm185, %v184, -inf
    %v197 = vmax.f32 %v195, %v196
    %v198 = vrot.slane %v197, 4
    %v199 = vmax.f32 %v197, %v198
    %v200 = vrot.slane %v199, 2
    %v201 = vmax.f32 %v199, %v200
    %v202 = vrot.slane %v201, 1
    %v203 = vmax.f32 %v201, %v202
    %v204 = vld [vmem:[%s2] sm:$0x1]
    %v206 = vlaneseq
    %v207 = vshrl.u32 %v206, 7
    %v208 = vsub.s32 0, %v207
    %v209 = vrot.slane %v204, %v208
    %v211 = vadd.f32 %v194, %v209
    %v212 = vadd.f32 %v203, %v209
    %v213 = vmax.f32 %v211, 0.0
    %v214 = vmax.f32 %v212, 0.0
    %v215 = vld [vmem:[%s3] sm:$0xff]
    %v216 = vld [vmem:[%s3 + $0x8] sm:$0xff]
    %v217 = vld [vmem:[%s3 + $0x10] sm:$0xff]
    %v218 = vld [vmem:[%s4] sm:$0x1]
    %v220 = vlaneseq
    %v221 = vshrl.u32 %v220, 7
    %v222 = vsub.s32 0, %v221
    %v223 = vrot.slane %v218, %v222
    %v227 = vrot.slane %v214, 7
    %vm228 = vcmask 1041409
    %v229 = vsel %vm228, %v227, %v213
    %v230 = vsel %vm185, %v229, 0
    %232 = vmatprep.subr.mxu0 0.0
    %233 = vmatpush1.msra.mxu0 %v215
    %234 = vmatprep.subr.mxu0 0.0
    %235 = vmatpush1.msra.mxu0 %v216
    %236 = vmatprep.subr.mxu0 0.0
    %237 = vmatpush1.msra.mxu0 %v217
    %238 = vmatprep.subr.mxu0 0.0
    %239 = vmatpush1.msra.mxu0 0.0
    %240 = vmatprep.subr.mxu0 0.0
    %241 = vmatpush1.msra.mxu0 0.0
    %242 = vmatprep.subr.mxu0 0.0
    %243 = vmatpush1.msra.mxu0 0.0
    %244 = vmatprep.subr.mxu0 0.0
    %245 = vmatpush1.msra.mxu0 0.0
    %246 = vmatprep.subr.mxu0 0.0
    %247 = vmatpush1.msra.mxu0 0.0
    %248 = vmatprep.subr.mxu0 0.0
    %249 = vmatpush1.msra.mxu0 0.0
    %250 = vmatprep.subr.mxu0 0.0
    %251 = vmatpush1.msra.mxu0 0.0
    %252 = vmatprep.subr.mxu0 0.0
    %253 = vmatpush1.msra.mxu0 0.0
    %254 = vmatprep.subr.mxu0 0.0
    %255 = vmatpush1.msra.mxu0 0.0
    %256 = vmatprep.subr.mxu0 0.0
    %257 = vmatpush1.msra.mxu0 0.0
    %258 = vmatprep.subr.mxu0 0.0
    %259 = vmatpush1.msra.mxu0 0.0
    %260 = vmatprep.subr.mxu0 0.0
    %261 = vmatpush1.msra.mxu0 0.0
    %262 = vmatprep.subr.mxu0 0.0
    %263 = vmatpush1.msra.mxu0 0.0
    %264 = vmatprep.subr.mxu0 0.0
    %265 = vmatpush1.msra.mxu0 0.0
    %266 = vmatprep.subr.mxu0 0.0
    %267 = vmatpush1.msra.mxu0 0.0
    %268 = vmatprep.subr.mxu0 0.0
    %269 = vmatpush1.msra.mxu0 0.0
    %270 = vmatprep.subr.mxu0 0.0
    %271 = vmatpush1.msra.mxu0 0.0
    %272 = vmatprep.subr.mxu0 0.0
    %273 = vmatpush1.msra.mxu0 0.0
    %274 = vmatprep.subr.mxu0 0.0
    %275 = vmatpush1.msra.mxu0 0.0
    %276 = vmatprep.subr.mxu0 0.0
    %277 = vmatpush1.msra.mxu0 0.0
    %278 = vmatprep.subr.mxu0 0.0
    %279 = vmatpush1.msra.mxu0 0.0
    %280 = vmatprep.subr.mxu0 0.0
    %281 = vmatpush1.msra.mxu0 0.0
    %282 = vmatprep.subr.mxu0 0.0
    %283 = vmatpush1.msra.mxu0 0.0
    %284 = vmatprep.subr.mxu0 0.0
    %285 = vmatpush1.msra.mxu0 0.0
    %286 = vmatprep.subr.mxu0 0.0
    %287 = vmatpush1.msra.mxu0 0.0
    %288 = vmatprep.subr.mxu0 0.0
    %289 = vmatpush1.msra.mxu0 0.0
    %290 = vmatprep.subr.mxu0 0.0
    %291 = vmatpush1.msra.mxu0 0.0
    %292 = vmatprep.subr.mxu0 0.0
    %293 = vmatpush1.msra.mxu0 0.0
    %294 = vmatprep.subr.mxu0 0.0
    %295 = vmatpush1.msra.mxu0 0.0
    %296 = vmatprep.mubr.f32.mxu0 0.0
    %297 = vmatmul.mubr.f32.gmra.mrb[0].mxu0 %v230
    %v298 = vpop.f32.mrb[0].mxu0
    %v299 = vadd.f32 %v223, %v298
    %v300 = vpop.f32.mrb[0].mxu0
    %301 = vdwg.mxu0
    %vm302 = vcmask 25600
    %303 = vst.msk [vmem:[#allocation2] sm:$0x3] %vm302, %v299
    // Predicated region
    $region22: #{textcnn_forward.1} parent=1 // pred_check
      _
    $region23: #{textcnn_forward.1} parent=1 // pred_check_branch
      %305 = sbr.rel (0) target = $region25
    $region24: #{textcnn_forward.1} parent=1 // pred_region
      %s307 = ssub.s32 32, 32
      %308 = vsyncadd [#allocation3], %s307
      %s310 = sshll.u32 [#allocation2], 4
      %s311 = int_to_ptr.vmem [resolvable:$true] %s310
      %313 = dma.vmem_to_hbm [thread:$0]  %s311, 32, %s5, [#allocation3]
    $region25: #{textcnn_forward.1} parent=1 // pred_fallthru
      _
    // Predicated region
    $region26: #{textcnn_forward.1} parent=1 // pred_check
      _
    $region27: #{textcnn_forward.1} parent=1 // pred_check_branch
      %315 = sbr.rel (0) target = $region29
    $region28: #{textcnn_forward.1} parent=1 // pred_region
      %316 = dma.done [#allocation3], 32
    $region29: #{textcnn_forward.1} parent=1 // pred_fallthru
      _
    %317 = vsyncpa [#allocation3], 1

</llo_original>
